<compile_context>
chip_gen: v7x
topology: tpu7x:2x2x1
jax: 0.10.0
libtpu: 0.0.40
codegen_flags: <defaults>
</compile_context>

<pallas_src>
import jax
import jax.numpy as jnp
from jax import lax
from jax.experimental import pallas as pl
from jax.experimental.pallas import tpu as pltpu


# Switch to the tiled two-pass scheme when the fused single-pass per-sample tile
# (double-buffered I/O + f32 temporaries) would exceed this budget.
_SINGLE_PASS_VMEM_BUDGET = 12 * 1024 * 1024
# Per-block working-set target for the two-pass kernels.
_TWO_PASS_BLOCK_BYTES = 2 * 1024 * 1024


# ---------------------------------------------------------------------------
# Fused single-pass kernel: whole (C, HW) sample resident in VMEM.
# ---------------------------------------------------------------------------
def _make_fused_adalin_kernel(eps, hw, c, apply_relu, has_residual):
    hw_f = float(hw)
    chw_f = float(c * hw)

    def kernel(*refs):
        if has_residual:
            x_ref, res_ref, rho_ref, gamma_ref, beta_ref, o_ref = refs
        else:
            x_ref, rho_ref, gamma_ref, beta_ref, o_ref = refs
            res_ref = None

        x = x_ref[...].astype(jnp.float32)                     # (C, HW)

        # One sweep: per-channel sum and sum-of-squares (f32 accumulation).
        s = jnp.sum(x, axis=1, keepdims=True)                  # (C, 1)
        q = jnp.sum(x * x, axis=1, keepdims=True)              # (C, 1)

        # Instance-norm stats (unbiased, divisor HW-1).
        in_mean = s / hw_f
        in_var = (q - hw_f * in_mean * in_mean) / (hw_f - 1.0)
        inv_in = lax.rsqrt(in_var + eps)                       # (C, 1) -> EUP

        # Layer-norm stats derived from the per-channel partials (divisor C*HW-1).
        ln_mean = jnp.sum(s, keepdims=True) / chw_f            # (1, 1)
        ln_var = (jnp.sum(q, keepdims=True) - chw_f * ln_mean * ln_mean) / (chw_f - 1.0)
        inv_ln = lax.rsqrt(ln_var + eps)                       # (1, 1)

        rho = rho_ref[...].astype(jnp.float32)                 # (C, 1)
        gamma = gamma_ref[...].astype(jnp.float32)
        beta = beta_ref[...].astype(jnp.float32)

        # Fold AdaLIN into a per-channel scale/bias: out = x * a + b.
        a_in = rho * inv_in
        a_ln = (1.0 - rho) * inv_ln
        a = gamma * (a_in + a_ln)                              # (C, 1)
        b = beta - gamma * (a_in * in_mean + a_ln * ln_mean)   # (C, 1)

        out = x * a + b                                        # single full-tile FMA
        if apply_relu:
            out = jnp.maximum(out, 0.0)
        if has_residual:
            out = out + res_ref[...].astype(jnp.float32)
        o_ref[...] = out.astype(o_ref.dtype)

    return kernel


# ---------------------------------------------------------------------------
# Two-pass kernels (HW tiled): stats/accumulate -> per-channel (a, b), then apply.
# ---------------------------------------------------------------------------
def _make_stats_kernel(eps, hw, c):
    hw_f = float(hw)
    chw_f = float(c * hw)

    def kernel(x_ref, rho_ref, gamma_ref, beta_ref, a_ref, b_ref, s_ref, q_ref):
        h = pl.program_id(1)

        @pl.when(h == 0)
        def _():
            s_ref[...] = jnp.zeros_like(s_ref)
            q_ref[...] = jnp.zeros_like(q_ref)

        x = x_ref[...].astype(jnp.float32)                     # (C, hw_blk)
        s_ref[...] += jnp.sum(x, axis=1, keepdims=True)
        q_ref[...] += jnp.sum(x * x, axis=1, keepdims=True)

        @pl.when(h == pl.num_programs(1) - 1)
        def _():
            s = s_ref[...]
            q = q_ref[...]
            in_mean = s / hw_f
            in_var = (q - hw_f * in_mean * in_mean) / (hw_f - 1.0)
            inv_in = lax.rsqrt(in_var + eps)
            ln_mean = jnp.sum(s, keepdims=True) / chw_f
            ln_var = (jnp.sum(q, keepdims=True) - chw_f * ln_mean * ln_mean) / (chw_f - 1.0)
            inv_ln = lax.rsqrt(ln_var + eps)

            rho = rho_ref[...].astype(jnp.float32)
            gamma = gamma_ref[...].astype(jnp.float32)
            beta = beta_ref[...].astype(jnp.float32)

            a_in = rho * inv_in
            a_ln = (1.0 - rho) * inv_ln
            a_ref[...] = gamma * (a_in + a_ln)
            b_ref[...] = beta - gamma * (a_in * in_mean + a_ln * ln_mean)

    return kernel


def _make_apply_kernel(apply_relu, has_residual):
    def kernel(*refs):
        if has_residual:
            x_ref, a_ref, b_ref, res_ref, o_ref = refs
        else:
            x_ref, a_ref, b_ref, o_ref = refs
            res_ref = None
        x = x_ref[...].astype(jnp.float32)
        out = x * a_ref[...] + b_ref[...]
        if apply_relu:
            out = jnp.maximum(out, 0.0)
        if has_residual:
            out = out + res_ref[...].astype(jnp.float32)
        o_ref[...] = out.astype(o_ref.dtype)

    return kernel


# ---------------------------------------------------------------------------
# Wrappers.
# ---------------------------------------------------------------------------
def _pick_hw_block(hw, c, itemsize):
    """Largest 128-aligned divisor of hw whose (C, blk) f32 block fits the target."""
    target = max(128, (_TWO_PASS_BLOCK_BYTES // max(1, c * itemsize)) // 128 * 128)
    if hw <= target:
        return hw
    blk = min(target, (hw // 128) * 128)
    while blk >= 128:
        if hw % blk == 0:
            return blk
        blk -= 128
    return hw  # no 128-aligned divisor -> whole row (block == full dim, still legal)


def _adalin_single_pass(x3, rho3, gamma3, beta3, res3, eps, apply_relu):
    N, C, HW = x3.shape
    has_res = res3 is not None
    kernel = _make_fused_adalin_kernel(float(eps), HW, C, apply_relu, has_res)

    tile_spec = pl.BlockSpec((None, C, HW), lambda n: (n, 0, 0))
    vec_spec = pl.BlockSpec((None, C, 1), lambda n: (n, 0, 0))
    rho_spec = pl.BlockSpec((None, C, 1), lambda n: (0, 0, 0))

    in_specs = [tile_spec]
    inputs = [x3]
    if has_res:
        in_specs.append(tile_spec)
        inputs.append(res3)
    in_specs += [rho_spec, vec_spec, vec_spec]
    inputs += [rho3, gamma3, beta3]

    return pl.pallas_call(
        kernel,
        out_shape=jax.ShapeDtypeStruct((N, C, HW), x3.dtype),
        grid_spec=pltpu.PrefetchScalarGridSpec(
            num_scalar_prefetch=0,
            grid=(N,),
            in_specs=in_specs,
            out_specs=tile_spec,
        ),
        compiler_params=pltpu.CompilerParams(
            dimension_semantics=("parallel",)),
    )(*inputs)


def _adalin_two_pass(x3, rho3, gamma3, beta3, res3, eps, apply_relu, hw_block, itemsize):
    N, C, HW = x3.shape
    has_res = res3 is not None

    if hw_block is None:
        hw_block = _pick_hw_block(HW, C, itemsize)
    assert HW % hw_block == 0, "hw_block must divide H*W"
    nhw = HW // hw_block

    blk_spec = pl.BlockSpec((None, C, hw_block), lambda n, h: (n, 0, h))
    vec_spec = pl.BlockSpec((None, C, 1), lambda n, h: (n, 0, 0))
    rho_spec = pl.BlockSpec((None, C, 1), lambda n, h: (0, 0, 0))

    # Pass 1: per-channel sum/sumsq accumulated over HW blocks -> per-channel (a, b).
    a, b = pl.pallas_call(
        _make_stats_kernel(float(eps), HW, C),
        out_shape=(jax.ShapeDtypeStruct((N, C, 1), jnp.float32),
                   jax.ShapeDtypeStruct((N, C, 1), jnp.float32)),
        grid_spec=pltpu.PrefetchScalarGridSpec(
            num_scalar_prefetch=0,
            grid=(N, nhw),
            in_specs=[blk_spec, rho_spec, vec_spec, vec_spec],
            out_specs=(vec_spec, vec_spec),
            scratch_shapes=[pltpu.VMEM((C, 1), jnp.float32),
                            pltpu.VMEM((C, 1), jnp.float32)],
        ),
        compiler_params=pltpu.CompilerParams(
            dimension_semantics=("parallel", "arbitrary")),
    )(x3, rho3, gamma3, beta3)

    # Pass 2: fully parallel apply, out = x*a + b (+ fused ReLU / residual).
    in_specs = [blk_spec, vec_spec, vec_spec]
    inputs = [x3, a, b]
    if has_res:
        in_specs.append(blk_spec)
        inputs.append(res3)

    return pl.pallas_call(
        _make_apply_kernel(apply_relu, has_res),
        out_shape=jax.ShapeDtypeStruct((N, C, HW), x3.dtype),
        grid_spec=pltpu.PrefetchScalarGridSpec(
            num_scalar_prefetch=0,
            grid=(N, nhw),
            in_specs=in_specs,
            out_specs=blk_spec,
        ),
        compiler_params=pltpu.CompilerParams(
            dimension_semantics=("parallel", "parallel")),
    )(*inputs)


def adalin(x, rho, gamma, beta, *, eps=1e-5, apply_relu=False, residual=None,
           force_two_pass=False, hw_block=None):
    """AdaLIN forward (optionally fused with a trailing ReLU and/or residual add).

    x: (N, C, H, W); rho: (1, C, 1, 1); gamma/beta: (N, C, 1, 1). Returns (N, C, H, W).
    """
    N, C, H, W = x.shape
    HW = H * W

    x3 = x.reshape(N, C, HW)
    rho3 = jnp.asarray(rho).reshape(1, C, 1)
    gamma3 = jnp.asarray(gamma).reshape(N, C, 1)
    beta3 = jnp.asarray(beta).reshape(N, C, 1)
    res3 = residual.reshape(N, C, HW) if residual is not None else None

    itemsize = jnp.dtype(x.dtype).itemsize
    n_io_tiles = 4 + (2 if res3 is not None else 0)              # double-buffered I/O
    vmem_est = n_io_tiles * C * HW * itemsize + 3 * C * HW * 4   # + f32 temporaries
    two_pass = force_two_pass or vmem_est > _SINGLE_PASS_VMEM_BUDGET

    if two_pass:
        out3 = _adalin_two_pass(x3, rho3, gamma3, beta3, res3, eps, apply_relu,
                                hw_block, itemsize)
    else:
        out3 = _adalin_single_pass(x3, rho3, gamma3, beta3, res3, eps, apply_relu)
    return out3.reshape(N, C, H, W)


# ---------------------------------------------------------------------------
# ResnetAdaLINBlock forward.
# ---------------------------------------------------------------------------
def _reflect_pad_conv3x3(x, w, b):
    # ReflectionPad2d(1) + Conv2d(k=3, stride=1, padding=0, NCHW/OIHW).
    xp = jnp.pad(x, ((0, 0), (0, 0), (1, 1), (1, 1)), mode="reflect")
    out = lax.conv_general_dilated(
        xp, w, window_strides=(1, 1), padding="VALID",
        dimension_numbers=("NCHW", "OIHW", "NCHW"))
    if b is not None:
        out = out + b.reshape(1, -1, 1, 1)
    return out


def resnet_adalin_block(x, gamma, beta, params, *, eps=1e-5,
                        force_two_pass=False, hw_block=None):
    """pad+conv1 -> AdaLIN(+fused ReLU) -> pad+conv2 -> AdaLIN(+fused residual x)."""
    # TODO(synk): reflection-pad + 3x3 conv stay as XLA ops (lax.conv already maps to
    # the MXU); only the AdaLIN (+ fused ReLU / residual) stages are Pallas kernels.
    out = _reflect_pad_conv3x3(x, params["conv1_w"], params.get("conv1_b"))
    out = adalin(out, params["rho1"], gamma, beta, eps=eps, apply_relu=True,
                 force_two_pass=force_two_pass, hw_block=hw_block)
    out = _reflect_pad_conv3x3(out, params["conv2_w"], params.get("conv2_b"))
    out = adalin(out, params["rho2"], gamma, beta, eps=eps, residual=x,
                 force_two_pass=force_two_pass, hw_block=hw_block)
    return out


# ---------------------------------------------------------------------------
# Pure-JAX references mirroring the PyTorch forward (unbiased variances).
# ---------------------------------------------------------------------------
def adalin_ref(x, rho, gamma, beta, *, eps=1e-5):
    N, C = x.shape[0], x.shape[1]
    rho = jnp.asarray(rho).reshape(1, C, 1, 1)
    gamma = jnp.asarray(gamma).reshape(N, C, 1, 1)
    beta = jnp.asarray(beta).reshape(N, C, 1, 1)
    in_mean = jnp.mean(x, axis=(2, 3), keepdims=True)
    in_var = jnp.var(x, axis=(2, 3), keepdims=True, ddof=1)
    out_in = (x - in_mean) / jnp.sqrt(in_var + eps)
    ln_mean = jnp.mean(x, axis=(1, 2, 3), keepdims=True)
    ln_var = jnp.var(x, axis=(1, 2, 3), keepdims=True, ddof=1)
    out_ln = (x - ln_mean) / jnp.sqrt(ln_var + eps)
    out = rho * out_in + (1.0 - rho) * out_ln
    return out * gamma + beta


def resnet_adalin_block_ref(x, gamma, beta, params, *, eps=1e-5):
    out = _reflect_pad_conv3x3(x, params["conv1_w"], params.get("conv1_b"))
    out = adalin_ref(out, params["rho1"], gamma, beta, eps=eps)
    out = jnp.maximum(out, 0.0)
    out = _reflect_pad_conv3x3(out, params["conv2_w"], params.get("conv2_b"))
    out = adalin_ref(out, params["rho2"], gamma, beta, eps=eps)
    return out + x


if __name__ == "__main__":
    key = jax.random.PRNGKey(0)
    N, C, H, W = 2, 4, 16, 16
    keys = jax.random.split(key, 7)

    x = jax.random.normal(keys[0], (N, C, H, W), dtype=jnp.float32)
    gamma = jax.random.normal(keys[1], (N, C, 1, 1), dtype=jnp.float32)
    beta = jax.random.normal(keys[2], (N, C, 1, 1), dtype=jnp.float32)
    params = {
        "conv1_w": jax.random.normal(keys[3], (C, C, 3, 3), dtype=jnp.float32) * 0.1,
        "conv1_b": jax.random.normal(keys[4], (C,), dtype=jnp.float32) * 0.1,
        "conv2_w": jax.random.normal(keys[5], (C, C, 3, 3), dtype=jnp.float32) * 0.1,
        "conv2_b": jax.random.normal(keys[6], (C,), dtype=jnp.float32) * 0.1,
        # Module __init__: rho is (1, num_features, 1, 1) filled with 0.9.
        "rho1": jnp.full((1, C, 1, 1), 0.9, dtype=jnp.float32),
        "rho2": jnp.full((1, C, 1, 1), 0.9, dtype=jnp.float32),
    }
    rho = params["rho1"]

    # 1) standalone AdaLIN, fused single-pass path.
    out1 = jax.block_until_ready(adalin(x, rho, gamma, beta))
    ref1 = adalin_ref(x, rho, gamma, beta)
    assert out1.shape == (N, C, H, W)
    assert jnp.allclose(out1, ref1, atol=2e-4, rtol=2e-4), "single-pass AdaLIN mismatch"

    # 2) tiled two-pass path (stats accumulator + parallel apply), exercised explicitly.
    out2 = jax.block_until_ready(
        adalin(x, rho, gamma, beta, force_two_pass=True, hw_block=128))
    assert jnp.allclose(out2, ref1, atol=2e-4, rtol=2e-4), "two-pass AdaLIN mismatch"

    # 3) full ResnetAdaLINBlock forward (convs via XLA, AdaLIN+ReLU / AdaLIN+residual Pallas).
    out3 = jax.block_until_ready(resnet_adalin_block(x, gamma, beta, params))
    ref3 = resnet_adalin_block_ref(x, gamma, beta, params)
    assert out3.shape == (N, C, H, W)
    assert jnp.allclose(out3, ref3, atol=5e-4, rtol=5e-4), "ResnetAdaLINBlock mismatch"

    print("KERNEL_OK")
</pallas_src>

<mosaic_0001>
module attributes {stable_mosaic.version = 11 : i64} {
  func.func @kernel(%arg0: i32, %arg1: memref<1x4x256xf32, #tpu.memory_space<vmem>>, %arg2: memref<1x4x1xf32, #tpu.memory_space<vmem>>, %arg3: memref<1x4x1xf32, #tpu.memory_space<vmem>>, %arg4: memref<1x4x1xf32, #tpu.memory_space<vmem>>, %arg5: memref<1x4x256xf32, #tpu.memory_space<vmem>>) attributes {dimension_semantics = [#tpu.dimension_semantics<parallel>], iteration_bounds = array<i64: 2>, scalar_prefetch = 0 : i64, scratch_operands = 0 : i64, tpu.core_type = #tpu.core_type<tc>, window_params = [{transform_indices = @transform_0, window_bounds = array<i64: 1, 4, 256>}, {pipeline_mode = #tpu.pipeline_mode<synchronous>, transform_indices = @transform_1, window_bounds = array<i64: 1, 4, 1>}, {transform_indices = @transform_2, window_bounds = array<i64: 1, 4, 1>}, {transform_indices = @transform_3, window_bounds = array<i64: 1, 4, 1>}, {transform_indices = @transform_4, window_bounds = array<i64: 1, 4, 256>}]} {
    %c0 = arith.constant 0 : index
    %c0_0 = arith.constant 0 : index
    %c0_1 = arith.constant 0 : index
    %0 = vector.load %arg1[%c0, %c0_0, %c0_1] : memref<1x4x256xf32, #tpu.memory_space<vmem>>, vector<1x4x256xf32>
    %1 = vector.shape_cast %0 : vector<1x4x256xf32> to vector<4x256xf32>
    %cst = arith.constant dense<0.000000e+00> : vector<4xf32>
    %2 = vector.multi_reduction <add>, %1, %cst [1] : vector<4x256xf32> to vector<4xf32>
    %3 = vector.shape_cast %2 : vector<4xf32> to vector<4x1xf32>
    %4 = arith.mulf %1, %1 : vector<4x256xf32>
    %cst_2 = arith.constant dense<0.000000e+00> : vector<4xf32>
    %5 = vector.multi_reduction <add>, %4, %cst_2 [1] : vector<4x256xf32> to vector<4xf32>
    %6 = vector.shape_cast %5 : vector<4xf32> to vector<4x1xf32>
    %cst_3 = arith.constant 2.560000e+02 : f32
    %7 = vector.broadcast %cst_3 : f32 to vector<4x1xf32>
    %8 = arith.divf %3, %7 : vector<4x1xf32>
    %cst_4 = arith.constant 2.560000e+02 : f32
    %9 = vector.broadcast %cst_4 : f32 to vector<4x1xf32>
    %10 = arith.mulf %9, %8 : vector<4x1xf32>
    %11 = arith.mulf %10, %8 : vector<4x1xf32>
    %12 = arith.subf %6, %11 : vector<4x1xf32>
    %cst_5 = arith.constant 2.550000e+02 : f32
    %13 = vector.broadcast %cst_5 : f32 to vector<4x1xf32>
    %14 = arith.divf %12, %13 : vector<4x1xf32>
    %cst_6 = arith.constant 9.99999974E-6 : f32
    %15 = vector.broadcast %cst_6 : f32 to vector<4x1xf32>
    %16 = arith.addf %14, %15 : vector<4x1xf32>
    %17 = math.rsqrt %16 : vector<4x1xf32>
    %18 = vector.shape_cast %3 : vector<4x1xf32> to vector<1x4x1xf32>
    %cst_7 = arith.constant dense<0.000000e+00> : vector<1xf32>
    %19 = vector.multi_reduction <add>, %18, %cst_7 [1, 2] : vector<1x4x1xf32> to vector<1xf32>
    %20 = vector.shape_cast %19 : vector<1xf32> to vector<1x1x1xf32>
    %21 = vector.extract %20[0, 0, 0] : f32 from vector<1x1x1xf32>
    %22 = vector.broadcast %21 : f32 to vector<1x1xf32>
    %cst_8 = arith.constant 1.024000e+03 : f32
    %23 = vector.broadcast %cst_8 : f32 to vector<1x1xf32>
    %24 = arith.divf %22, %23 : vector<1x1xf32>
    %25 = vector.shape_cast %6 : vector<4x1xf32> to vector<1x4x1xf32>
    %cst_9 = arith.constant dense<0.000000e+00> : vector<1xf32>
    %26 = vector.multi_reduction <add>, %25, %cst_9 [1, 2] : vector<1x4x1xf32> to vector<1xf32>
    %27 = vector.shape_cast %26 : vector<1xf32> to vector<1x1x1xf32>
    %28 = vector.extract %27[0, 0, 0] : f32 from vector<1x1x1xf32>
    %29 = vector.broadcast %28 : f32 to vector<1x1xf32>
    %cst_10 = arith.constant 1.024000e+03 : f32
    %30 = vector.broadcast %cst_10 : f32 to vector<1x1xf32>
    %31 = arith.mulf %30, %24 : vector<1x1xf32>
    %32 = arith.mulf %31, %24 : vector<1x1xf32>
    %33 = arith.subf %29, %32 : vector<1x1xf32>
    %cst_11 = arith.constant 1.023000e+03 : f32
    %34 = vector.broadcast %cst_11 : f32 to vector<1x1xf32>
    %35 = arith.divf %33, %34 : vector<1x1xf32>
    %cst_12 = arith.constant 9.99999974E-6 : f32
    %36 = vector.broadcast %cst_12 : f32 to vector<1x1xf32>
    %37 = arith.addf %35, %36 : vector<1x1xf32>
    %38 = math.rsqrt %37 : vector<1x1xf32>
    %c0_13 = arith.constant 0 : index
    %c0_14 = arith.constant 0 : index
    %c0_15 = arith.constant 0 : index
    %39 = vector.load %arg2[%c0_13, %c0_14, %c0_15] : memref<1x4x1xf32, #tpu.memory_space<vmem>>, vector<1x4x1xf32>
    %40 = vector.shape_cast %39 : vector<1x4x1xf32> to vector<4x1xf32>
    %c0_16 = arith.constant 0 : index
    %c0_17 = arith.constant 0 : index
    %c0_18 = arith.constant 0 : index
    %41 = vector.load %arg3[%c0_16, %c0_17, %c0_18] : memref<1x4x1xf32, #tpu.memory_space<vmem>>, vector<1x4x1xf32>
    %42 = vector.shape_cast %41 : vector<1x4x1xf32> to vector<4x1xf32>
    %c0_19 = arith.constant 0 : index
    %c0_20 = arith.constant 0 : index
    %c0_21 = arith.constant 0 : index
    %43 = vector.load %arg4[%c0_19, %c0_20, %c0_21] : memref<1x4x1xf32, #tpu.memory_space<vmem>>, vector<1x4x1xf32>
    %44 = vector.shape_cast %43 : vector<1x4x1xf32> to vector<4x1xf32>
    %45 = arith.mulf %40, %17 : vector<4x1xf32>
    %cst_22 = arith.constant 1.000000e+00 : f32
    %46 = vector.broadcast %cst_22 : f32 to vector<4x1xf32>
    %47 = arith.subf %46, %40 : vector<4x1xf32>
    %48 = vector.broadcast %38 : vector<1x1xf32> to vector<4x1xf32>
    %49 = arith.mulf %47, %48 : vector<4x1xf32>
    %50 = arith.addf %45, %49 : vector<4x1xf32>
    %51 = arith.mulf %42, %50 : vector<4x1xf32>
    %52 = arith.mulf %45, %8 : vector<4x1xf32>
    %53 = vector.broadcast %24 : vector<1x1xf32> to vector<4x1xf32>
    %54 = arith.mulf %49, %53 : vector<4x1xf32>
    %55 = arith.addf %52, %54 : vector<4x1xf32>
    %56 = arith.mulf %42, %55 : vector<4x1xf32>
    %57 = arith.subf %44, %56 : vector<4x1xf32>
    %58 = vector.broadcast %51 : vector<4x1xf32> to vector<4x256xf32>
    %59 = arith.mulf %1, %58 : vector<4x256xf32>
    %60 = vector.broadcast %57 : vector<4x1xf32> to vector<4x256xf32>
    %61 = arith.addf %59, %60 : vector<4x256xf32>
    %c0_23 = arith.constant 0 : index
    %c0_24 = arith.constant 0 : index
    %c0_25 = arith.constant 0 : index
    %62 = vector.load %arg5[%c0_23, %c0_24, %c0_25] : memref<1x4x256xf32, #tpu.memory_space<vmem>>, vector<1x4x256xf32>
    %63 = vector.shape_cast %62 : vector<1x4x256xf32> to vector<4x256xf32>
    %64 = vector.shape_cast %61 : vector<4x256xf32> to vector<1x4x256xf32>
    tpu.vector_store %arg5[%c0_23, %c0_24, %c0_25], %64 {strides = array<i32>} : memref<1x4x256xf32, #tpu.memory_space<vmem>>, vector<1x4x256xf32>,
    return
  }
  func.func @transform_0(%arg0: i32) -> (i32, i32, i32) {
    %c0_i32 = arith.constant 0 : i32
    %c0_i32_0 = arith.constant 0 : i32
    %c0_i32_1 = arith.constant 0 : i32
    return %arg0, %c0_i32, %c0_i32_0 : i32, i32, i32
  }
  func.func @transform_1(%arg0: i32) -> (i32, i32, i32) {
    %c0_i32 = arith.constant 0 : i32
    %c0_i32_0 = arith.constant 0 : i32
    %c0_i32_1 = arith.constant 0 : i32
    %c0_i32_2 = arith.constant 0 : i32
    return %c0_i32, %c0_i32_0, %c0_i32_1 : i32, i32, i32
  }
  func.func @transform_2(%arg0: i32) -> (i32, i32, i32) {
    %c0_i32 = arith.constant 0 : i32
    %c0_i32_0 = arith.constant 0 : i32
    %c0_i32_1 = arith.constant 0 : i32
    return %arg0, %c0_i32, %c0_i32_0 : i32, i32, i32
  }
  func.func @transform_3(%arg0: i32) -> (i32, i32, i32) {
    %c0_i32 = arith.constant 0 : i32
    %c0_i32_0 = arith.constant 0 : i32
    %c0_i32_1 = arith.constant 0 : i32
    return %arg0, %c0_i32, %c0_i32_0 : i32, i32, i32
  }
  func.func @transform_4(%arg0: i32) -> (i32, i32, i32) {
    %c0_i32 = arith.constant 0 : i32
    %c0_i32_0 = arith.constant 0 : i32
    %c0_i32_1 = arith.constant 0 : i32
    return %arg0, %c0_i32, %c0_i32_0 : i32, i32, i32
  }
}

</mosaic_0001>

<llo_original>
// kernel: tpu_custom_call.1
$region0: #{tpu_custom_call.1}
  #allocation0 [shape = 'u32[]', space=smem, size = 0x4, offset = 0x4, fixed_abs, tag = 'smem constant byte address 0x4 - core index']
  #allocation1 [shape = 'u32[144,128]{1,0:T(1,128)}', space=vmem, size = 0x12000, scoped, tag = 'internal scratch']
  %s0 = inlined_call_operand.vmem [shape: f32[2,4,256], index: 0, kind: input, shape index: {}]
  %s1 = inlined_call_operand.vmem [shape: f32[1,4,1], index: 1, kind: input, shape index: {}]
  %s2 = inlined_call_operand.vmem [shape: f32[2,4,1], index: 2, kind: input, shape index: {}]
  %s3 = inlined_call_operand.vmem [shape: f32[2,4,1], index: 3, kind: input, shape index: {}]
  %s4 = inlined_call_operand.hbm [shape: f32[2,4,256], index: 4, kind: output, shape index: {}]
  %s5 = sld [smem:[#allocation0]]
  $region49: #{tpu_custom_call.1} parent=0
    _
  %s7 = ssub.s32 1, %s5
  %s8 = scalar_select 0, %s7, %s5
  $region1: #{tpu_custom_call.1} parent=0
    #allocation2 [shape = 'u8[8192]{0}', space=vmem, size = 0x2000, scoped, tag = 'output window, operand 0']
    #allocation3 [shape = 's32[2]{0}', space=sflag, size = 0x8, scoped, tag = 'scoped memory for tpu_custom_call.1']
    %9 = vsyncpa [#allocation3], 0
    %s10 = scalar_lea.sflag [#allocation3], 1
    %11 = vsyncpa %s10, 0
    loop: start=0, step=1, limit=4
    $region2: #{tpu_custom_call.1} parent=1 // loop_pre_header
      _
    $region3: #{tpu_custom_call.1} parent=1 // loop_header
      %s13 = sphi 0, %s17
      %p14 = scmp.ge.s32.totalorder %s13, 4
      %s23 = sphi 0, %s25
      %s26 = sphi 0, %s23
      %s27 = sphi 0, %s26
      %s43 = sphi 0, %s27
      %s47 = sphi 0, %s47
      %s49 = sphi 0, %s47
      %s50 = sphi 0, %s49
      %s64 = sphi 0, %s50
      %s70 = sphi 0, %s72
      %s73 = sphi 0, %s70
      %s74 = sphi 0, %s73
      %s90 = sphi 0, %s74
      %s96 = sphi 0, %s98
      %s99 = sphi 0, %s96
      %s100 = sphi 0, %s99
      %s116 = sphi 0, %s100
      %s122 = sphi 0, %s124
      %s125 = sphi 0, %s122
      %s126 = sphi 0, %s125
      %s142 = sphi 0, %s126
    $region4: #{tpu_custom_call.1} parent=1 // loop_header_branch
      %16 = sbr.rel (%p14) target = $region8
    $region5: #{tpu_custom_call.1} parent=1 // loop_body
      %s18 = ssub.s32 %s13, 1
      %s19 = ssub.s32 %s13, 2
      %s20 = sadd.s32 %s13, 1
      %s21 = ssub.s32 %s13, %s20
      %p22 = scmp.eq.s32.totalorder %s21, 0
      %s24 = sadd.s32 %s23, 1
      %s25 = scalar_select %p22, %s23, %s24
      %p28 = pneg %p22
      %p29 = scmp.eq.s32.totalorder %s13, 1
      %p30 = por %p28, %p29
      %p31 = scmp.ne.s32.totalorder %s23, %s26
      %p32 = scmp.eq.s32.totalorder %s13, 0
      %p33 = por %p31, %p32
      %p34 = scmp.ne.s32.totalorder %s23, %s26
      %p35 = scmp.eq.s32.totalorder %s18, 1
      %p36 = por %p34, %p35
      %p37 = scmp.ne.s32.totalorder %s26, %s27
      %p38 = scmp.eq.s32.totalorder %s18, 0
      %p39 = por %p37, %p38
      %p40 = scmp.ne.s32.totalorder %s26, %s27
      %p41 = scmp.eq.s32.totalorder %s19, 1
      %p42 = por %p40, %p41
      %p44 = scmp.ne.s32.totalorder %s27, %s43
      %p45 = scmp.eq.s32.totalorder %s19, 0
      %p46 = por %p44, %p45
      %s48 = sadd.s32 %s47, 1
      %p51 = scmp.eq.s32.totalorder %s13, 1
      %p52 = scmp.ne.s32.totalorder %s47, %s49
      %p53 = scmp.eq.s32.totalorder %s13, 0
      %p54 = por %p52, %p53
      %p55 = scmp.ne.s32.totalorder %s47, %s49
      %p56 = scmp.eq.s32.totalorder %s18, 1
      %p57 = por %p55, %p56
      %p58 = scmp.ne.s32.totalorder %s49, %s50
      %p59 = scmp.eq.s32.totalorder %s18, 0
      %p60 = por %p58, %p59
      %p61 = scmp.ne.s32.totalorder %s49, %s50
      %p62 = scmp.eq.s32.totalorder %s19, 1
      %p63 = por %p61, %p62
      %p65 = scmp.ne.s32.totalorder %s50, %s64
      %p66 = scmp.eq.s32.totalorder %s19, 0
      %p67 = por %p65, %p66
      %s68 = ssub.s32 %s13, %s20
      %p69 = scmp.eq.s32.totalorder %s68, 0
      %s71 = sadd.s32 %s70, 1
      %s72 = scalar_select %p69, %s70, %s71
      %p75 = pneg %p69
      %p76 = scmp.eq.s32.totalorder %s13, 1
      %p77 = por %p75, %p76
      %p78 = scmp.ne.s32.totalorder %s70, %s73
      %p79 = scmp.eq.s32.totalorder %s13, 0
      %p80 = por %p78, %p79
      %p81 = scmp.ne.s32.totalorder %s70, %s73
      %p82 = scmp.eq.s32.totalorder %s18, 1
      %p83 = por %p81, %p82
      %p84 = scmp.ne.s32.totalorder %s73, %s74
      %p85 = scmp.eq.s32.totalorder %s18, 0
      %p86 = por %p84, %p85
      %p87 = scmp.ne.s32.totalorder %s73, %s74
      %p88 = scmp.eq.s32.totalorder %s19, 1
      %p89 = por %p87, %p88
      %p91 = scmp.ne.s32.totalorder %s74, %s90
      %p92 = scmp.eq.s32.totalorder %s19, 0
      %p93 = por %p91, %p92
      %s94 = ssub.s32 %s13, %s20
      %p95 = scmp.eq.s32.totalorder %s94, 0
      %s97 = sadd.s32 %s96, 1
      %s98 = scalar_select %p95, %s96, %s97
      %p101 = pneg %p95
      %p102 = scmp.eq.s32.totalorder %s13, 1
      %p103 = por %p101, %p102
      %p104 = scmp.ne.s32.totalorder %s96, %s99
      %p105 = scmp.eq.s32.totalorder %s13, 0
      %p106 = por %p104, %p105
      %p107 = scmp.ne.s32.totalorder %s96, %s99
      %p108 = scmp.eq.s32.totalorder %s18, 1
      %p109 = por %p107, %p108
      %p110 = scmp.ne.s32.totalorder %s99, %s100
      %p111 = scmp.eq.s32.totalorder %s18, 0
      %p112 = por %p110, %p111
      %p113 = scmp.ne.s32.totalorder %s99, %s100
      %p114 = scmp.eq.s32.totalorder %s19, 1
      %p115 = por %p113, %p114
      %p117 = scmp.ne.s32.totalorder %s100, %s116
      %p118 = scmp.eq.s32.totalorder %s19, 0
      %p119 = por %p117, %p118
      %s120 = ssub.s32 %s13, %s20
      %p121 = scmp.eq.s32.totalorder %s120, 0
      %s123 = sadd.s32 %s122, 1
      %s124 = scalar_select %p121, %s122, %s123
      %p127 = pneg %p121
      %p128 = scmp.eq.s32.totalorder %s13, 1
      %p129 = por %p127, %p128
      %p130 = scmp.ne.s32.totalorder %s122, %s125
      %p131 = scmp.eq.s32.totalorder %s13, 0
      %p132 = por %p130, %p131
      %p133 = scmp.ne.s32.totalorder %s122, %s125
      %p134 = scmp.eq.s32.totalorder %s18, 1
      %p135 = por %p133, %p134
      %p136 = scmp.ne.s32.totalorder %s125, %s126
      %p137 = scmp.eq.s32.totalorder %s18, 0
      %p138 = por %p136, %p137
      %p139 = scmp.ne.s32.totalorder %s125, %s126
      %p140 = scmp.eq.s32.totalorder %s19, 1
      %p141 = por %p139, %p140
      %p143 = scmp.ne.s32.totalorder %s126, %s142
      %p144 = scmp.eq.s32.totalorder %s19, 0
      %p145 = por %p143, %p144
      %p146 = scmp.le.s32.totalorder 1, %s13
      %p147 = scmp.lt.s32.totalorder %s13, 3
      %p148 = pnand %p146, %p147
      %p149 = pneg %p148
      // Predicated region
      $region9: #{tpu_custom_call.1} parent=5 // pred_check
        _
      $region10: #{tpu_custom_call.1} parent=5 // pred_check_branch
        %151 = sbr.rel (%p148) target = $region12
      $region11: #{tpu_custom_call.1} parent=5 // pred_region
        %s152 = ssub.s32 %s13, 1
        // Predicated region
        $region13: #{tpu_custom_call.1} parent=11 // pred_check
          %p153 = pneg %p60
        $region14: #{tpu_custom_call.1} parent=11 // pred_check_branch
          %155 = sbr.rel (%p153) target = $region16
        $region15: #{tpu_custom_call.1} parent=11 // pred_region
          _
        $region16: #{tpu_custom_call.1} parent=11 // pred_fallthru
          _
      $region12: #{tpu_custom_call.1} parent=5 // pred_fallthru
        _
      %p156 = scmp.lt.s32.totalorder %s13, 2
      // Predicated region
      $region17: #{tpu_custom_call.1} parent=5 // pred_check
        %p157 = pneg %p156
      $region18: #{tpu_custom_call.1} parent=5 // pred_check_branch
        %159 = sbr.rel (%p157) target = $region20
      $region19: #{tpu_custom_call.1} parent=5 // pred_region
        // Predicated region
        $region21: #{tpu_custom_call.1} parent=19 // pred_check
          %p160 = pneg %p33
        $region22: #{tpu_custom_call.1} parent=19 // pred_check_branch
          %162 = sbr.rel (%p160) target = $region24
        $region23: #{tpu_custom_call.1} parent=19 // pred_region
          %p163 = scmp.lt.s32.totalorder %s13, 1
          %s164 = scalar_select %p163, %s13, 1
          %s165 = smul.addr %s164, 2
          %s166 = smul.addr %s165, 4
          %s167 = scalar_lea.vmem %s0, %s166
        $region24: #{tpu_custom_call.1} parent=19 // pred_fallthru
          _
        // Predicated region
        $region25: #{tpu_custom_call.1} parent=19 // pred_check
          %p168 = pneg %p80
        $region26: #{tpu_custom_call.1} parent=19 // pred_check_branch
          %170 = sbr.rel (%p168) target = $region28
        $region27: #{tpu_custom_call.1} parent=19 // pred_region
          %p171 = scmp.lt.s32.totalorder %s13, 1
          %s172 = scalar_select %p171, %s13, 1
          %s173 = smul.addr %s172, 4
          %s174 = scalar_lea.vmem %s2, %s173
        $region28: #{tpu_custom_call.1} parent=19 // pred_fallthru
          _
        // Predicated region
        $region29: #{tpu_custom_call.1} parent=19 // pred_check
          %p175 = pneg %p106
        $region30: #{tpu_custom_call.1} parent=19 // pred_check_branch
          %177 = sbr.rel (%p175) target = $region32
        $region31: #{tpu_custom_call.1} parent=19 // pred_region
          %p178 = scmp.lt.s32.totalorder %s13, 1
          %s179 = scalar_select %p178, %s13, 1
          %s180 = smul.addr %s179, 4
          %s181 = scalar_lea.vmem %s3, %s180
        $region32: #{tpu_custom_call.1} parent=19 // pred_fallthru
          _
      $region20: #{tpu_custom_call.1} parent=5 // pred_fallthru
        _
      %p182 = scmp.le.s32.totalorder 1, %s13
      %p183 = scmp.lt.s32.totalorder %s13, 3
      %p184 = pnand %p182, %p183
      %p185 = pneg %p184
      // Predicated region
      $region33: #{tpu_custom_call.1} parent=5 // pred_check
        _
      $region34: #{tpu_custom_call.1} parent=5 // pred_check_branch
        %187 = sbr.rel (%p184) target = $region36
      $region35: #{tpu_custom_call.1} parent=5 // pred_region
        %s188 = ssub.s32 %s13, 1
        %p189 = scmp.lt.s32.totalorder %s18, 1
        %s190 = scalar_select %p189, %s18, 1
        %s191 = smul.addr %s190, 2
        %s192 = smul.addr %s191, 4
        %s193 = scalar_lea.vmem %s0, %s192
        %p194 = pneg %p39
        %p195 = pneg %p36
        %p196 = pneg %p60
        %p197 = pneg %p57
        %p198 = scmp.lt.s32.totalorder %s18, 1
        %s199 = scalar_select %p198, %s18, 1
        %s200 = smul.addr %s199, 4
        %s201 = scalar_lea.vmem %s2, %s200
        %p202 = pneg %p86
        %p203 = pneg %p83
        %p204 = scmp.lt.s32.totalorder %s18, 1
        %s205 = scalar_select %p204, %s18, 1
        %s206 = smul.addr %s205, 4
        %s207 = scalar_lea.vmem %s3, %s206
        %p208 = pneg %p112
        %p209 = pneg %p109
        %p210 = pneg %p138
        %p211 = pneg %p135
        %s212 = sand.u32 %s125, 1
        %s213 = scalar_lea.sflag [#allocation3], %s212
        %s214 = sand.u32 %s125, 1
        %s215 = smul.addr %s214, 8
        %s216 = scalar_lea.vmem [#allocation2], %s215
        %p217 = scmp.lt.s32.totalorder %s18, 1
        %s218 = scalar_select %p217, %s18, 1
        %s219 = smul.addr %s218, 2
        %s220 = smul.addr %s219, 4
        %s221 = scalar_lea.vmem %s0, %s220
        %p222 = scmp.lt.s32.totalorder %s18, 1
        %s223 = scalar_select %p222, %s18, 1
        %s224 = smul.addr %s223, 4
        %s225 = scalar_lea.vmem %s2, %s224
        %p226 = scmp.lt.s32.totalorder %s18, 1
        %s227 = scalar_select %p226, %s18, 1
        %s228 = smul.addr %s227, 4
        %s229 = scalar_lea.vmem %s3, %s228
        %v230 = vld [vmem:[%s221] sm:$0xff]
        %v232 = vcombine.high %v230, %v230
        %vm234 = vcmask 1043456
        %v235 = vsel %vm234, %v230, 0.0
        %v236 = vsel %vm234, %v232, 0.0
        %v237 = vadd.f32 %v235, %v236
        %238 = vadd.xlane.f32.xlu0 %v237
        %v239 = vpop.xlane.xlu0 %238
        %v240 = vmul.f32 %v230, %v230
        %v242 = vcombine.high %v240, %v240
        %v244 = vsel %vm234, %v240, 0.0
        %v245 = vsel %vm234, %v242, 0.0
        %v246 = vadd.f32 %v244, %v245
        %247 = vadd.xlane.f32.xlu0 %v246
        %v248 = vpop.xlane.xlu0 %247
        %v249 = vrcp.pop 256.0
        %v250 = vmul.f32 %v239, %v249
        %v251 = vmul.f32 %v250, 256.0
        %v252 = vmul.f32 %v251, %v250
        %v253 = vsub.f32 %v248, %v252
        %v254 = vrcp.pop 255.0
        %v255 = vmul.f32 %v253, %v254
        %v256 = vadd.f32 %v255, 1e-05
        %v257 = vrsqrt.pop %v256
        %vm258 = vcmask 3072
        %v259 = vsel %vm258, %v239, 0.0
        %260 = vadd.xlane.f32.xlu0 %v259
        %v261 = vpop.xlane.xlu0 %260
        %v262 = vrot.slane %v261, 4
        %v263 = vadd.f32 %v261, %v262
        %v264 = vrot.slane %v263, 2
        %v265 = vadd.f32 %v263, %v264
        %v266 = vrot.slane %v265, 1
        %v267 = vadd.f32 %v265, %v266
        %s268 = vtos %v267
        %v269 = vstv %s268
        %v270 = vrcp.pop 1024.0
        %v271 = vmul.f32 %v269, %v270
        %v272 = vsel %vm258, %v248, 0.0
        %273 = vadd.xlane.f32.xlu0 %v272
        %v274 = vpop.xlane.xlu0 %273
        %v275 = vrot.slane %v274, 4
        %v276 = vadd.f32 %v274, %v275
        %v277 = vrot.slane %v276, 2
        %v278 = vadd.f32 %v276, %v277
        %v279 = vrot.slane %v278, 1
        %v280 = vadd.f32 %v278, %v279
        %s281 = vtos %v280
        %v282 = vstv %s281
        %v283 = vmul.f32 %v271, 1024.0
        %v284 = vmul.f32 %v283, %v271
        %v285 = vsub.f32 %v282, %v284
        %v286 = vrcp.pop 1023.0
        %v287 = vmul.f32 %v285, %v286
        %v288 = vadd.f32 %v287, 1e-05
        %v289 = vrsqrt.pop %v288
        %v290 = vld [vmem:[%s1] sm:$0xf]
        %v291 = vld [vmem:[%s225] sm:$0xf]
        %v292 = vld [vmem:[%s229] sm:$0xf]
        %v293 = vmul.f32 %v290, %v257
        %v294 = vsub.f32 1.0, %v290
        %v295 = vmul.f32 %v294, %v289
        %v296 = vadd.f32 %v293, %v295
        %v297 = vmul.f32 %v291, %v296
        %v298 = vmul.f32 %v293, %v250
        %v299 = vmul.f32 %v295, %v271
        %v300 = vadd.f32 %v298, %v299
        %v301 = vmul.f32 %v291, %v300
        %v302 = vsub.f32 %v292, %v301
        %304 = vset.pattern.permute.xlu0 0
        %305 = vperm.xlu0 %304, %v297
        %v306 = vpop.permute.xlu0 %305
        %v308 = vunpack.c.l.s4 839922192
        %v309 = vunpack.c.0.s8 %v308
        %v310 = vlaneseq
        %v311 = vshrl.u32 %v310, 7
        %v312 = vsub.s32 %v309, %v311
        %v313 = vrot.slane %v306, %v312
        %v315 = vmul.f32 %v230, %v313
        %317 = vset.pattern.permute.xlu0 0
        %318 = vperm.xlu0 %317, %v302
        %v319 = vpop.permute.xlu0 %318
        %v321 = vunpack.c.l.s4 839922192
        %v322 = vunpack.c.0.s8 %v321
        %v323 = vlaneseq
        %v324 = vshrl.u32 %v323, 7
        %v325 = vsub.s32 %v322, %v324
        %v326 = vrot.slane %v319, %v325
        %v328 = vadd.f32 %v315, %v326
        %329 = vst [vmem:[%s216] sm:$0xff] %v328
        %s330 = sand.u32 %s125, 1
        %s331 = scalar_lea.sflag [#allocation3], %s330
        %s332 = sand.u32 %s125, 1
        %s333 = smul.addr %s332, 8
        %s334 = scalar_lea.vmem [#allocation2], %s333
        // Predicated region
        $region37: #{tpu_custom_call.1} parent=35 // pred_check
          %p335 = pneg %p135
        $region38: #{tpu_custom_call.1} parent=35 // pred_check_branch
          %337 = sbr.rel (%p335) target = $region40
        $region39: #{tpu_custom_call.1} parent=35 // pred_region
          %s339 = ssub.s32 128, 128
          %340 = vsyncadd %s331, %s339
          %s341 = smul.addr %s18, 2
          %s342 = smul.addr %s341, 64
          %s343 = scalar_lea.hbm %s4, %s342
          %s345 = sshll.u32 %s334, 4
          %s346 = int_to_ptr.vmem [resolvable:$true] %s345
          %348 = dma.vmem_to_hbm [thread:$0]  %s346, 128, %s343, %s331
        $region40: #{tpu_custom_call.1} parent=35 // pred_fallthru
          _
      $region36: #{tpu_custom_call.1} parent=5 // pred_fallthru
        _
      %p349 = scmp.le.s32.totalorder 2, %s13
      // Predicated region
      $region41: #{tpu_custom_call.1} parent=5 // pred_check
        %p350 = pneg %p349
      $region42: #{tpu_custom_call.1} parent=5 // pred_check_branch
        %352 = sbr.rel (%p350) target = $region44
      $region43: #{tpu_custom_call.1} parent=5 // pred_region
        %s353 = ssub.s32 %s13, 2
        // Predicated region
        $region45: #{tpu_custom_call.1} parent=43 // pred_check
          %p354 = pneg %p141
        $region46: #{tpu_custom_call.1} parent=43 // pred_check_branch
          %356 = sbr.rel (%p354) target = $region48
        $region47: #{tpu_custom_call.1} parent=43 // pred_region
          %s357 = sand.u32 %s126, 1
          %s358 = scalar_lea.sflag [#allocation3], %s357
          %s359 = sand.u32 %s126, 1
          %s360 = smul.addr %s359, 8
          %s361 = scalar_lea.vmem [#allocation2], %s360
          %362 = dma.done %s358, 128
        $region48: #{tpu_custom_call.1} parent=43 // pred_fallthru
          _
      $region44: #{tpu_custom_call.1} parent=5 // pred_fallthru
        _
    $region6: #{tpu_custom_call.1} parent=1 // loop_footer
      %s17 = sadd.s32 1, %s13
    $region7: #{tpu_custom_call.1} parent=1 // loop_footer_branch
      %12 = sbr.rel target = $region3
    $region8: #{tpu_custom_call.1} parent=1 // loop_exit
      _
    %363 = vsyncpa [#allocation3], 1
    %s364 = scalar_lea.sflag [#allocation3], 1
    %365 = vsyncpa %s364, 1

</llo_original>
